<compile_context>
chip_gen: v7x
topology: tpu7x:2x2x1
jax: 0.10.0
libtpu: 0.0.40
codegen_flags: <defaults>
</compile_context>

<pallas_src>
import jax
import jax.numpy as jnp
from jax.experimental import pallas as pl
from jax.experimental.pallas import tpu as pltpu


_SQRT_2_OVER_PI = 0.7978845608028654
# gelu_new(x) = 0.5*x*(1 + tanh(c*(x + 0.044715*x^3))),  c = sqrt(2/pi)
#             = x * sigmoid(2*c*x + 2*c*0.044715*x^3)       (exact identity)
_GELU_LIN = 2.0 * _SQRT_2_OVER_PI               # 1.5957691216057308
_GELU_CUB = 2.0 * _SQRT_2_OVER_PI * 0.044715    # 0.0713548162723...


def _gelu_new_ref(x):
    # HF/mindnlp "gelu_new" (tanh approximation) — reference form for testing.
    return 0.5 * x * (1.0 + jnp.tanh(_SQRT_2_OVER_PI * (x + 0.044715 * x * x * x)))


def _round_up(x, m):
    return (x + m - 1) // m * m


def _vmem_budget_bytes():
    # Leave headroom for Mosaic internal scratch; the conservative fallback (48 MiB)
    # is safe even on v7x (64 MiB physical VMEM per TensorCore).
    try:
        cap = int(pltpu.get_tpu_info().vmem_capacity_bytes)
    except Exception:
        cap = 64 * 1024 * 1024
    return cap * 3 // 4


def _intermediate_kernel(x_ref, w_ref, b_ref, o_ref):
    # x_ref: (tm, H) native dtype; w_ref: (H, tn) native dtype (pre-transposed);
    # b_ref: (1, tn) f32; o_ref: (tm, tn) native dtype.
    y = jnp.dot(x_ref[...], w_ref[...], preferred_element_type=jnp.float32)
    y = y + b_ref[...]
    # gelu_new(y) = y * sigmoid(2*c*y + 2*c*0.044715*y^3); sigmoid -> EUP slot.
    o_ref[...] = (y * jax.nn.sigmoid(y * (_GELU_LIN + _GELU_CUB * (y * y)))).astype(
        o_ref.dtype)


def fnet_intermediate(hidden_states, weight, bias):
    """FNetIntermediate forward: gelu_new(hidden_states @ weight.T + bias).

    hidden_states: (B, S, H); weight: (I, H) as nn.Linear stores it; bias: (I,).
    """
    B, S, H = hidden_states.shape
    I = weight.shape[0]
    M = B * S

    x2d = hidden_states.reshape(M, H)                  # rows streamed, NOT padded
    Ip = _round_up(I, 128)

    # Weight consumed in canonical (K, N) layout; transpose once at call time.
    w_t = weight.T                                     # (H, I)
    b2d = bias.astype(jnp.float32).reshape(1, I)       # f32 bias: no per-step cast
    if Ip != I:
        w_t = jnp.pad(w_t, ((0, 0), (0, Ip - I)))
        b2d = jnp.pad(b2d, ((0, 0), (0, Ip - I)))

    x_bytes = jnp.dtype(hidden_states.dtype).itemsize
    w_bytes = jnp.dtype(w_t.dtype).itemsize
    out_dtype = hidden_states.dtype
    out_bytes = jnp.dtype(out_dtype).itemsize

    budget = _vmem_budget_bytes()
    tm_cap = max(8, _round_up(min(M, 1024), 8))

    def vmem_need(tm, tn):
        return (2 * H * tn * w_bytes                   # weight (double-buffered alloc)
                + 2 * tm * H * x_bytes                 # activation, double-buffered
                + 2 * tm * tn * out_bytes              # output, double-buffered
                + 2 * 8 * tn * 4                       # f32 bias (sublane-padded)
                + tm * tn * 4)                         # f32 accumulator / epilogue temps

    def pick_tm(tn):
        for t in (1024, 512, 384, 256, 128, 64, 32, 16, 8):
            if t <= tm_cap and vmem_need(t, tn) <= budget:
                return t
        return None

    tm_eff = pick_tm(Ip)
    if tm_eff is not None:
        # Weight fully resident: 1-D grid over rows, activation read from HBM once.
        tn_eff = Ip
        grid = (pl.cdiv(M, tm_eff),)
        in_specs = [
            pl.BlockSpec((tm_eff, H), lambda i: (i, 0)),
            pl.BlockSpec((H, tn_eff), lambda i: (0, 0)),   # grid-invariant: DMA'd once
            pl.BlockSpec((1, tn_eff), lambda i: (0, 0)),
        ]
        out_specs = pl.BlockSpec((tm_eff, tn_eff), lambda i: (i, 0))
        semantics = ("parallel",)
        x_passes = 1
    else:
        # Fallback for very large intermediate sizes: tile I as well (m innermost so
        # the weight tile stays resident across the row sweep).
        tn_eff = min(Ip, 2048)
        tm_eff = pick_tm(tn_eff) or 8
        grid = (pl.cdiv(Ip, tn_eff), pl.cdiv(M, tm_eff))
        in_specs = [
            pl.BlockSpec((tm_eff, H), lambda j, i: (i, 0)),
            pl.BlockSpec((H, tn_eff), lambda j, i: (0, j)),
            pl.BlockSpec((1, tn_eff), lambda j, i: (0, j)),
        ]
        out_specs = pl.BlockSpec((tm_eff, tn_eff), lambda j, i: (i, j))
        semantics = ("parallel", "parallel")
        x_passes = pl.cdiv(Ip, tn_eff)

    need = vmem_need(tm_eff, tn_eff)
    vmem_limit = int(min(budget, max(need + (4 << 20), 32 << 20)))

    cost = pl.CostEstimate(
        flops=2 * M * H * Ip,
        transcendentals=M * Ip,                         # one logistic per output element
        bytes_accessed=(x_passes * M * H * x_bytes + H * Ip * w_bytes
                        + Ip * 4 + M * Ip * out_bytes),
    )

    out2d = pl.pallas_call(
        _intermediate_kernel,
        out_shape=jax.ShapeDtypeStruct((M, Ip), out_dtype),
        grid_spec=pltpu.PrefetchScalarGridSpec(
            num_scalar_prefetch=0,
            grid=grid,
            in_specs=in_specs,
            out_specs=out_specs,
        ),
        compiler_params=pltpu.CompilerParams(
            dimension_semantics=semantics,
            vmem_limit_bytes=vmem_limit,
        ),
        cost_estimate=cost,
    )(x2d, w_t, b2d)

    return out2d[:, :I].reshape(B, S, I)


if __name__ == "__main__":
    key = jax.random.PRNGKey(0)

    # small FNet-like config: batch=2, seq=8, hidden=32, intermediate=128
    B, S, H, I = 2, 8, 32, 128
    kx, kw, kb = jax.random.split(key, 3)
    x = jax.random.normal(kx, (B, S, H), dtype=jnp.float32)
    weight = jax.random.normal(kw, (I, H), dtype=jnp.float32) * 0.02  # nn.Linear (out, in)
    bias = jax.random.normal(kb, (I,), dtype=jnp.float32) * 0.02

    out = fnet_intermediate(x, weight, bias)
    jax.block_until_ready(out)

    ref = _gelu_new_ref(jnp.einsum("bsh,ih->bsi", x, weight) + bias)
    assert out.shape == (B, S, I)
    assert jnp.allclose(out, ref, atol=1e-4, rtol=1e-4), "mismatch vs reference"

    # ragged shape (exercises the OOB last row block + weight/bias column padding)
    B2, S2, H2, I2 = 1, 5, 32, 100
    k2x, k2w, k2b = jax.random.split(jax.random.PRNGKey(1), 3)
    x2 = jax.random.normal(k2x, (B2, S2, H2), dtype=jnp.float32)
    w2 = jax.random.normal(k2w, (I2, H2), dtype=jnp.float32) * 0.02
    b2 = jax.random.normal(k2b, (I2,), dtype=jnp.float32) * 0.02
    out2 = fnet_intermediate(x2, w2, b2)
    jax.block_until_ready(out2)
    ref2 = _gelu_new_ref(jnp.einsum("bsh,ih->bsi", x2, w2) + b2)
    assert out2.shape == (B2, S2, I2)
    assert jnp.allclose(out2, ref2, atol=1e-4, rtol=1e-4), "mismatch vs reference (ragged)"

    print("KERNEL_OK")
</pallas_src>

<mosaic_0001>
module attributes {stable_mosaic.version = 11 : i64} {
  func.func @_intermediate_kernel(%arg0: i32, %arg1: memref<16x32xf32, #tpu.memory_space<vmem>>, %arg2: memref<32x128xf32, #tpu.memory_space<vmem>>, %arg3: memref<1x128xf32, #tpu.memory_space<vmem>>, %arg4: memref<16x128xf32, #tpu.memory_space<vmem>>) attributes {dimension_semantics = [#tpu.dimension_semantics<parallel>], iteration_bounds = array<i64: 1>, scalar_prefetch = 0 : i64, scratch_operands = 0 : i64, tpu.core_type = #tpu.core_type<tc>, window_params = [{transform_indices = @transform_0, window_bounds = array<i64: 16, 32>}, {pipeline_mode = #tpu.pipeline_mode<synchronous>, transform_indices = @transform_1, window_bounds = array<i64: 32, 128>}, {pipeline_mode = #tpu.pipeline_mode<synchronous>, transform_indices = @transform_2, window_bounds = array<i64: 1, 128>}, {transform_indices = @transform_3, window_bounds = array<i64: 16, 128>}]} {
    %c0 = arith.constant 0 : index
    %c0_0 = arith.constant 0 : index
    %0 = vector.load %arg1[%c0, %c0_0] : memref<16x32xf32, #tpu.memory_space<vmem>>, vector<16x32xf32>
    %c0_1 = arith.constant 0 : index
    %c0_2 = arith.constant 0 : index
    %1 = vector.load %arg2[%c0_1, %c0_2] : memref<32x128xf32, #tpu.memory_space<vmem>>, vector<32x128xf32>
    %cst = arith.constant dense<0.000000e+00> : vector<16x128xf32>
    %2 = tpu.matmul %0, %1, %cst {dimension_numbers = #tpu.dot_dimension_numbers<[1], [0], [0], [1], [0, 0, 1, 1], [], []>} : vector<16x32xf32>, vector<32x128xf32>, vector<16x128xf32> -> vector<16x128xf32>
    %c0_3 = arith.constant 0 : index
    %c0_4 = arith.constant 0 : index
    %3 = vector.load %arg3[%c0_3, %c0_4] : memref<1x128xf32, #tpu.memory_space<vmem>>, vector<1x128xf32>
    %4 = vector.broadcast %3 : vector<1x128xf32> to vector<16x128xf32>
    %5 = arith.addf %2, %4 : vector<16x128xf32>
    %6 = arith.mulf %5, %5 : vector<16x128xf32>
    %cst_5 = arith.constant 0.0713548139 : f32
    %7 = vector.broadcast %cst_5 : f32 to vector<16x128xf32>
    %8 = arith.mulf %7, %6 : vector<16x128xf32>
    %cst_6 = arith.constant 1.59576917 : f32
    %9 = vector.broadcast %cst_6 : f32 to vector<16x128xf32>
    %10 = arith.addf %9, %8 : vector<16x128xf32>
    %11 = arith.mulf %5, %10 : vector<16x128xf32>
    %12 = arith.negf %11 : vector<16x128xf32>
    %13 = math.exp %12 : vector<16x128xf32>
    %cst_7 = arith.constant 1.000000e+00 : f32
    %14 = vector.broadcast %cst_7 : f32 to vector<16x128xf32>
    %15 = arith.addf %14, %13 : vector<16x128xf32>
    %16 = arith.divf %14, %15 : vector<16x128xf32>
    %17 = arith.mulf %5, %16 : vector<16x128xf32>
    %c0_8 = arith.constant 0 : index
    %c0_9 = arith.constant 0 : index
    %18 = vector.load %arg4[%c0_8, %c0_9] : memref<16x128xf32, #tpu.memory_space<vmem>>, vector<16x128xf32>
    tpu.vector_store %arg4[%c0_8, %c0_9], %17 {strides = array<i32>} : memref<16x128xf32, #tpu.memory_space<vmem>>, vector<16x128xf32>,
    return
  }
  func.func @transform_0(%arg0: i32) -> (i32, i32) {
    %c0_i32 = arith.constant 0 : i32
    %c0_i32_0 = arith.constant 0 : i32
    return %arg0, %c0_i32 : i32, i32
  }
  func.func @transform_1(%arg0: i32) -> (i32, i32) {
    %c0_i32 = arith.constant 0 : i32
    %c0_i32_0 = arith.constant 0 : i32
    %c0_i32_1 = arith.constant 0 : i32
    return %c0_i32, %c0_i32_0 : i32, i32
  }
  func.func @transform_2(%arg0: i32) -> (i32, i32) {
    %c0_i32 = arith.constant 0 : i32
    %c0_i32_0 = arith.constant 0 : i32
    %c0_i32_1 = arith.constant 0 : i32
    return %c0_i32, %c0_i32_0 : i32, i32
  }
  func.func @transform_3(%arg0: i32) -> (i32, i32) {
    %c0_i32 = arith.constant 0 : i32
    %c0_i32_0 = arith.constant 0 : i32
    return %arg0, %c0_i32 : i32, i32
  }
}

</mosaic_0001>

<llo_original>
// kernel: tpu_custom_call.1
$region0: #{tpu_custom_call.1}
  #allocation0 [shape = 'u32[]', space=smem, size = 0x4, offset = 0x4, fixed_abs, tag = 'smem constant byte address 0x4 - core index']
  #allocation1 [shape = 'u32[144,128]{1,0:T(1,128)}', space=vmem, size = 0x12000, scoped, tag = 'internal scratch']
  %s0 = inlined_call_operand.hbm [shape: f32[16,32], index: 0, kind: input, shape index: {}]
  %s1 = inlined_call_operand.hbm [shape: f32[32,128], index: 1, kind: input, shape index: {}]
  %s2 = inlined_call_operand.vmem [shape: f32[1,128], index: 2, kind: input, shape index: {}]
  %s3 = inlined_call_operand.hbm [shape: f32[16,128], index: 3, kind: output, shape index: {}]
  %s4 = sld [smem:[#allocation0]]
  $region30: #{tpu_custom_call.1} parent=0
    _
  %s6 = ssub.s32 1, %s4
  %s7 = scalar_select 0, %s6, %s4
  $region1: #{tpu_custom_call.1} parent=0
    #allocation2 [shape = 'u8[8192]{0}', space=vmem, size = 0x2000, scoped, tag = 'input window, operand 0, single buffered']
    #allocation3 [shape = 's32[1]{0}', space=sflag, size = 0x4, scoped, tag = 'scoped memory for tpu_custom_call.1']
    #allocation4 [shape = 's32[1]{0}', space=sflag, size = 0x4, scoped, tag = 'scoped memory for tpu_custom_call.1']
    #allocation5 [shape = 'u8[16384]{0}', space=vmem, size = 0x4000, scoped, tag = 'input window, operand 1, single buffered']
    #allocation6 [shape = 's32[1]{0}', space=sflag, size = 0x4, scoped, tag = 'scoped memory for tpu_custom_call.1']
    #allocation7 [shape = 'u8[8192]{0}', space=vmem, size = 0x2000, scoped, tag = 'output window, operand 0, single buffered']
    %8 = vsyncpa [#allocation3], 0
    %9 = vsyncpa [#allocation6], 0
    %10 = vsyncpa [#allocation4], 0
    // Predicated region
    $region2: #{tpu_custom_call.1} parent=1 // pred_check
      _
    $region3: #{tpu_custom_call.1} parent=1 // pred_check_branch
      %12 = sbr.rel (0) target = $region5
    $region4: #{tpu_custom_call.1} parent=1 // pred_region
      %s14 = ssub.s32 256, 256
      %15 = vsyncadd [#allocation3], %s14
      %s16 = sshll.u32 [#allocation2], 4
      %s17 = int_to_ptr.vmem [resolvable:$true] %s16
      %22 = dma.hbm_to_vmem [thread:$0]  %s0, 256, %s17, [#allocation3], 128, 128, 8
    $region5: #{tpu_custom_call.1} parent=1 // pred_fallthru
      _
    // Predicated region
    $region6: #{tpu_custom_call.1} parent=1 // pred_check
      _
    $region7: #{tpu_custom_call.1} parent=1 // pred_check_branch
      %24 = sbr.rel (0) target = $region9
    $region8: #{tpu_custom_call.1} parent=1 // pred_region
      %s26 = ssub.s32 512, 512
      %27 = vsyncadd [#allocation6], %s26
      %s28 = sshll.u32 [#allocation5], 4
      %s29 = int_to_ptr.vmem [resolvable:$true] %s28
      %34 = dma.hbm_to_vmem [thread:$0]  %s1, 512, %s29, [#allocation6], 128, 128, 8
    $region9: #{tpu_custom_call.1} parent=1 // pred_fallthru
      _
    // Predicated region
    $region10: #{tpu_custom_call.1} parent=1 // pred_check
      _
    $region11: #{tpu_custom_call.1} parent=1 // pred_check_branch
      %36 = sbr.rel (0) target = $region13
    $region12: #{tpu_custom_call.1} parent=1 // pred_region
      _
    $region13: #{tpu_custom_call.1} parent=1 // pred_fallthru
      _
    // Predicated region
    $region14: #{tpu_custom_call.1} parent=1 // pred_check
      _
    $region15: #{tpu_custom_call.1} parent=1 // pred_check_branch
      %38 = sbr.rel (0) target = $region17
    $region16: #{tpu_custom_call.1} parent=1 // pred_region
      %39 = dma.done [#allocation3], 256
    $region17: #{tpu_custom_call.1} parent=1 // pred_fallthru
      _
    // Predicated region
    $region18: #{tpu_custom_call.1} parent=1 // pred_check
      _
    $region19: #{tpu_custom_call.1} parent=1 // pred_check_branch
      %41 = sbr.rel (0) target = $region21
    $region20: #{tpu_custom_call.1} parent=1 // pred_region
      %42 = dma.done [#allocation6], 512
    $region21: #{tpu_custom_call.1} parent=1 // pred_fallthru
      _
    %v43 = vld [vmem:[#allocation2] sm:$0xff]
    %v44 = vld [vmem:[#allocation2 + $0x8] sm:$0xff]
    %v45 = vld [vmem:[#allocation5] sm:$0xff]
    %v46 = vld [vmem:[#allocation5 + $0x8] sm:$0xff]
    %v47 = vld [vmem:[#allocation5 + $0x10] sm:$0xff]
    %v48 = vld [vmem:[#allocation5 + $0x18] sm:$0xff]
    %v49 = vld [vmem:[%s2] sm:$0x1]
    %v51 = vlaneseq
    %v52 = vshrl.u32 %v51, 7
    %v53 = vsub.s32 0, %v52
    %v54 = vrot.slane %v49, %v53
    %vm56 = vcmask 261120
    %v58 = vsel %vm56, %v43, 0
    %v61 = vsel %vm56, %v44, 0
    %63 = vmatprep.subr.mxu0 0.0
    %64 = vmatpush1.msra.mxu0 %v45
    %65 = vmatprep.subr.mxu0 0.0
    %66 = vmatpush1.msra.mxu0 %v46
    %67 = vmatprep.subr.mxu0 0.0
    %68 = vmatpush1.msra.mxu0 %v47
    %69 = vmatprep.subr.mxu0 0.0
    %70 = vmatpush1.msra.mxu0 %v48
    %71 = vmatprep.subr.mxu0 0.0
    %72 = vmatpush1.msra.mxu0 0.0
    %73 = vmatprep.subr.mxu0 0.0
    %74 = vmatpush1.msra.mxu0 0.0
    %75 = vmatprep.subr.mxu0 0.0
    %76 = vmatpush1.msra.mxu0 0.0
    %77 = vmatprep.subr.mxu0 0.0
    %78 = vmatpush1.msra.mxu0 0.0
    %79 = vmatprep.subr.mxu0 0.0
    %80 = vmatpush1.msra.mxu0 0.0
    %81 = vmatprep.subr.mxu0 0.0
    %82 = vmatpush1.msra.mxu0 0.0
    %83 = vmatprep.subr.mxu0 0.0
    %84 = vmatpush1.msra.mxu0 0.0
    %85 = vmatprep.subr.mxu0 0.0
    %86 = vmatpush1.msra.mxu0 0.0
    %87 = vmatprep.subr.mxu0 0.0
    %88 = vmatpush1.msra.mxu0 0.0
    %89 = vmatprep.subr.mxu0 0.0
    %90 = vmatpush1.msra.mxu0 0.0
    %91 = vmatprep.subr.mxu0 0.0
    %92 = vmatpush1.msra.mxu0 0.0
    %93 = vmatprep.subr.mxu0 0.0
    %94 = vmatpush1.msra.mxu0 0.0
    %95 = vmatprep.subr.mxu0 0.0
    %96 = vmatpush1.msra.mxu0 0.0
    %97 = vmatprep.subr.mxu0 0.0
    %98 = vmatpush1.msra.mxu0 0.0
    %99 = vmatprep.subr.mxu0 0.0
    %100 = vmatpush1.msra.mxu0 0.0
    %101 = vmatprep.subr.mxu0 0.0
    %102 = vmatpush1.msra.mxu0 0.0
    %103 = vmatprep.subr.mxu0 0.0
    %104 = vmatpush1.msra.mxu0 0.0
    %105 = vmatprep.subr.mxu0 0.0
    %106 = vmatpush1.msra.mxu0 0.0
    %107 = vmatprep.subr.mxu0 0.0
    %108 = vmatpush1.msra.mxu0 0.0
    %109 = vmatprep.subr.mxu0 0.0
    %110 = vmatpush1.msra.mxu0 0.0
    %111 = vmatprep.subr.mxu0 0.0
    %112 = vmatpush1.msra.mxu0 0.0
    %113 = vmatprep.subr.mxu0 0.0
    %114 = vmatpush1.msra.mxu0 0.0
    %115 = vmatprep.subr.mxu0 0.0
    %116 = vmatpush1.msra.mxu0 0.0
    %117 = vmatprep.subr.mxu0 0.0
    %118 = vmatpush1.msra.mxu0 0.0
    %119 = vmatprep.subr.mxu0 0.0
    %120 = vmatpush1.msra.mxu0 0.0
    %121 = vmatprep.subr.mxu0 0.0
    %122 = vmatpush1.msra.mxu0 0.0
    %123 = vmatprep.subr.mxu0 0.0
    %124 = vmatpush1.msra.mxu0 0.0
    %125 = vmatprep.subr.mxu0 0.0
    %126 = vmatpush1.msra.mxu0 0.0
    %127 = vmatprep.mubr.f32.mxu0 0.0
    %128 = vmatmul.mubr.f32.gmra.mrb[0].mxu0 %v58
    %v129 = vpop.f32.mrb[0].mxu0
    %v130 = vadd.f32 %v54, %v129
    %v131 = vpop.f32.mrb[0].mxu0
    %132 = vmatprep.mubr.f32.mxu0 0.0
    %133 = vmatmul.mubr.f32.gmra.mrb[0].mxu0 %v61
    %v134 = vpop.f32.mrb[0].mxu0
    %v135 = vadd.f32 %v54, %v134
    %v136 = vpop.f32.mrb[0].mxu0
    %137 = vdwg.mxu0
    %v138 = vmul.f32 %v130, %v130
    %v139 = vmul.f32 %v135, %v135
    %v140 = vmul.f32 %v138, 0.071354814
    %v141 = vmul.f32 %v139, 0.071354814
    %v142 = vadd.f32 %v140, 1.5957692
    %v143 = vadd.f32 %v141, 1.5957692
    %v144 = vmul.f32 %v130, %v142
    %v145 = vmul.f32 %v135, %v143
    %v146 = vxor.u32 %v144, 2147483648
    %v147 = vxor.u32 %v145, 2147483648
    %v148 = vmul.f32 %v146, 1.442695
    %v149 = vpow.pop %v148
    %v150 = vmul.f32 %v147, 1.442695
    %v151 = vpow.pop %v150
    %v152 = vadd.f32 %v149, 1.0
    %v153 = vadd.f32 %v151, 1.0
    %v154 = vrcp.pop %v152
    %v155 = vmul.f32 1.0, %v154
    %v156 = vrcp.pop %v153
    %v157 = vmul.f32 1.0, %v156
    %v158 = vmul.f32 %v130, %v155
    %v159 = vmul.f32 %v135, %v157
    %160 = vst [vmem:[#allocation7] sm:$0xff] %v158
    %161 = vst [vmem:[#allocation7 + $0x8] sm:$0xff] %v159
    // Predicated region
    $region22: #{tpu_custom_call.1} parent=1 // pred_check
      _
    $region23: #{tpu_custom_call.1} parent=1 // pred_check_branch
      %163 = sbr.rel (0) target = $region25
    $region24: #{tpu_custom_call.1} parent=1 // pred_region
      %s165 = ssub.s32 256, 256
      %166 = vsyncadd [#allocation4], %s165
      %s167 = sshll.u32 [#allocation7], 4
      %s168 = int_to_ptr.vmem [resolvable:$true] %s167
      %173 = dma.vmem_to_hbm [thread:$0]  %s168, 256, %s3, [#allocation4], 128, 128, 8
    $region25: #{tpu_custom_call.1} parent=1 // pred_fallthru
      _
    // Predicated region
    $region26: #{tpu_custom_call.1} parent=1 // pred_check
      _
    $region27: #{tpu_custom_call.1} parent=1 // pred_check_branch
      %175 = sbr.rel (0) target = $region29
    $region28: #{tpu_custom_call.1} parent=1 // pred_region
      %176 = dma.done [#allocation4], 256
    $region29: #{tpu_custom_call.1} parent=1 // pred_fallthru
      _
    %177 = vsyncpa [#allocation3], 1
    %178 = vsyncpa [#allocation6], 1
    %179 = vsyncpa [#allocation4], 1

</llo_original>
